<compile_context>
chip_gen: v7x
topology: tpu7x:2x2x1
jax: 0.10.0
libtpu: 0.0.40
codegen_flags: <defaults>
</compile_context>

<pallas_src>
import functools
import math

import jax
import jax.numpy as jnp
from jax import lax
from jax.experimental import pallas as pl
from jax.experimental.pallas import tpu as pltpu


def _focal_loss_kernel(x_ref, t_ref, *rest, gamma, s_valid, has_alpha):
    if has_alpha:
        a_ref, out_ref = rest
    else:
        (out_ref,) = rest

    si = pl.program_id(1)

    x = x_ref[0].astype(jnp.float32)          # (C, tile_s)  spatial on lanes
    t = t_ref[0].astype(jnp.int32)            # (1, tile_s)  targets
    c, tile_s = x.shape

    # Numerically stable log-softmax over the class axis (axis 0).  Each lane
    # (spatial position) is independent.
    m = jnp.max(x, axis=0, keepdims=True)                             # (1, ts)
    e = jnp.exp(x - m)                                                # (C, ts)
    sum_e = jnp.sum(e, axis=0, keepdims=True)                         # (1, ts)
    lse = jnp.log(sum_e) + m

    # gather(1, target) via a one-hot select over the (small) class axis; the
    # target logit is gathered *before* subtracting lse, so the full (C, ts)
    # log-prob tensor is never materialized.
    cls = lax.broadcasted_iota(jnp.int32, (c, tile_s), 0)
    onehot = cls == t                                                 # (C, ts)
    xt = jnp.sum(jnp.where(onehot, x, 0.0), axis=0, keepdims=True)    # (1, ts)
    et = jnp.sum(jnp.where(onehot, e, 0.0), axis=0, keepdims=True)    # (1, ts)
    logpt = xt - lse
    # pt = exp(logpt) without a second exp: et = exp(xt - m), so et / sum_e
    # == exp(xt - lse) == pt (saves one EUP transcendental per position).
    pt = et / sum_e

    if has_alpha:
        a = a_ref[...].astype(jnp.float32)                            # (C, 1)
        at = jnp.sum(jnp.where(onehot, a, 0.0), axis=0, keepdims=True)
        logpt = logpt * at

    one_minus_pt = 1.0 - pt
    g_is_int = (isinstance(gamma, int) and not isinstance(gamma, bool)) or (
        isinstance(gamma, float) and float(gamma).is_integer())
    if g_is_int and 0 <= int(gamma) <= 6:
        g = int(gamma)
        if g == 0:
            focal = jnp.ones_like(one_minus_pt)
        else:
            # Integer gamma: start from (1 - pt) and multiply gamma-1 times;
            # no float pow on the EUP, no ones tensor.
            focal = one_minus_pt
            for _ in range(g - 1):
                focal = focal * one_minus_pt
    else:
        focal = one_minus_pt ** jnp.float32(gamma)
    loss = -1.0 * focal * logpt                                       # (1, ts)

    # Mask lanes of the ragged last spatial tile (no wrapper-side padding).
    # jnp.where is a select, so garbage (even NaN/Inf) in out-of-bounds lanes
    # cannot leak into the sum.
    if s_valid % tile_s != 0:
        lane = lax.broadcasted_iota(jnp.int32, (1, tile_s), 1)
        loss = jnp.where(si * tile_s + lane < s_valid, loss, 0.0)

    # Per-(batch, spatial-tile) partial sum into this step's own output block.
    out_ref[...] = jnp.full((1, 1, 128), jnp.sum(loss), dtype=jnp.float32)


def focal_loss(logits, target, *, gamma=2, alpha=None, size_average=True,
               tile_s=None):
    """Pallas focal loss.

    logits: (N, C, *spatial) float (or (M, C) for the 2-D classification case)
    target: (N, *spatial) int      (or (M,))
    """
    if logits.ndim == 2:
        # Classification (M, C): transpose so classes sit on sublanes and the
        # sample axis is lane-dense.  This costs one extra HBM read+write of
        # logits (XLA transpose, ~2x traffic) but keeps vregs ~fully occupied
        # for small C, which is worth far more than the traffic on every
        # generation.
        # TODO(synk): for C >= 128 an untransposed (tile_m, C) kernel with the
        # class reduction across lanes would halve HBM traffic.
        n, c = 1, logits.shape[1]
        s = logits.shape[0]
        x = logits.T.reshape(1, c, s)
        t = target.reshape(1, 1, s)
    else:
        n, c = logits.shape[0], logits.shape[1]
        s = math.prod(logits.shape[2:])
        # Native NCHW layout: pure reshape, no transpose, no pad.
        x = logits.reshape(n, c, s)
        t = target.reshape(n, 1, s)

    # Keep narrow integer target dtypes (int8/int16 halve/quarter target HBM
    # traffic for small-C cases); widen anything else to int32.  The kernel
    # upcasts to int32 before the iota compare.
    if not (jnp.issubdtype(t.dtype, jnp.integer)
            and jnp.dtype(t.dtype).itemsize <= 4):
        t = t.astype(jnp.int32)

    has_alpha = alpha is not None
    if has_alpha:
        if isinstance(alpha, (float, int)):
            alpha = [alpha, 1.0 - alpha]
        a = jnp.asarray(alpha, jnp.float32).reshape(-1)
        if a.shape[0] < c:  # classes without an explicit weight get 1.0
            a = jnp.concatenate([a, jnp.ones((c - a.shape[0],), jnp.float32)])
        a = a[:c].reshape(c, 1)

    # Generation-aware VMEM budgeting: one logits block is capped at ~1/16 of
    # per-core VMEM (≈4 MiB on v7x's 64 MiB, ≈8 MiB on v5e/v6e's 128 MiB), and
    # the scoped VMEM limit is raised explicitly so double-buffered input
    # blocks plus a handful of f32 (C, tile_s) temporaries fit deliberately
    # (v5e's 16 MiB default scoped limit would otherwise block big tiles).
    try:
        vmem_cap = int(pltpu.get_tpu_info().vmem_capacity_bytes)
    except Exception:
        vmem_cap = 64 << 20  # conservative fallback (v7x per-TensorCore)
    block_cap = min(max(vmem_cap // 16, 1 << 20), 8 << 20)
    vmem_limit = int(min(vmem_cap * 3 // 4, 96 << 20))

    # f32 in-kernel temporaries dominate, so budget with >= 4 bytes/element.
    itemsize = max(jnp.dtype(logits.dtype).itemsize, 4)
    max_lanes = max(128, (block_cap // (c * itemsize)) // 128 * 128)
    if tile_s is None:
        tile_s = max_lanes            # let the VMEM cap pick the lane count
    else:
        tile_s = max(128, (min(int(tile_s), max_lanes) // 128) * 128)
    if tile_s >= s:
        tile_s = s                    # single full-extent block per batch row
    num_s = pl.cdiv(s, tile_s)

    kernel = functools.partial(_focal_loss_kernel, gamma=gamma, s_valid=s,
                               has_alpha=has_alpha)

    in_specs = [
        pl.BlockSpec((1, c, tile_s), lambda ni, si: (ni, 0, si)),   # logits
        pl.BlockSpec((1, 1, tile_s), lambda ni, si: (ni, 0, si)),   # targets
    ]
    args = [x, t]
    if has_alpha:
        in_specs.append(pl.BlockSpec((c, 1), lambda ni, si: (0, 0)))
        args.append(a)

    out = pl.pallas_call(
        kernel,
        out_shape=jax.ShapeDtypeStruct((n * num_s, 1, 128), jnp.float32),
        grid_spec=pltpu.PrefetchScalarGridSpec(
            num_scalar_prefetch=0,
            grid=(n, num_s),
            in_specs=in_specs,
            out_specs=pl.BlockSpec((1, 1, 128),
                                   lambda ni, si: (ni * num_s + si, 0, 0)),
        ),
        compiler_params=pltpu.CompilerParams(
            dimension_semantics=("parallel", "parallel"),
            vmem_limit_bytes=vmem_limit),
    )(*args)

    total = out[:, 0, 0].sum()            # tiny final reduce in plain JAX
    if size_average:
        total = total / jnp.float32(n * s)
    return total


def _focal_loss_ref(logits, target, *, gamma=2, alpha=None, size_average=True):
    """Pure-JAX reference mirroring the PyTorch forward."""
    n, c = logits.shape[0], logits.shape[1]
    x = logits.reshape(n, c, -1).transpose(0, 2, 1).reshape(-1, c)
    t = target.reshape(-1).astype(jnp.int32)
    logp = jax.nn.log_softmax(x, axis=1)
    logpt = jnp.take_along_axis(logp, t[:, None], axis=1)[:, 0]
    pt = jnp.exp(logpt)
    if alpha is not None:
        if isinstance(alpha, (float, int)):
            alpha = [alpha, 1.0 - alpha]
        a = jnp.asarray(alpha, jnp.float32)
        logpt = logpt * a[t]
    loss = -1.0 * (1.0 - pt) ** gamma * logpt
    return loss.mean() if size_average else loss.sum()


if __name__ == "__main__":
    key = jax.random.PRNGKey(0)
    k1, k2 = jax.random.split(key)

    N, C, H, W = 2, 4, 16, 16
    logits = jax.random.normal(k1, (N, C, H, W), dtype=jnp.float32)
    target = jax.random.randint(k2, (N, H, W), 0, C, dtype=jnp.int32)

    # Default module config: gamma=2, alpha=None, size_average=True.
    loss = focal_loss(logits, target, gamma=2, alpha=None, size_average=True)
    loss = jax.block_until_ready(loss)
    ref = _focal_loss_ref(logits, target, gamma=2, alpha=None,
                          size_average=True)
    assert jnp.allclose(loss, ref, rtol=1e-4, atol=1e-5), (loss, ref)

    # sum reduction
    loss_s = focal_loss(logits, target, gamma=2, alpha=None, size_average=False)
    loss_s = jax.block_until_ready(loss_s)
    ref_s = _focal_loss_ref(logits, target, gamma=2, alpha=None,
                            size_average=False)
    assert jnp.allclose(loss_s, ref_s, rtol=1e-4, atol=1e-4), (loss_s, ref_s)

    # per-class alpha weighting
    alpha = [0.1, 0.2, 0.3, 0.4]
    loss_a = focal_loss(logits, target, gamma=2, alpha=alpha, size_average=True)
    loss_a = jax.block_until_ready(loss_a)
    ref_a = _focal_loss_ref(logits, target, gamma=2, alpha=alpha,
                            size_average=True)
    assert jnp.allclose(loss_a, ref_a, rtol=1e-4, atol=1e-5), (loss_a, ref_a)

    print("KERNEL_OK")
</pallas_src>

<mosaic_0001>
module attributes {stable_mosaic.version = 11 : i64} {
  func.func @_focal_loss_kernel(%arg0: i32, %arg1: i32, %arg2: memref<1x4x256xf32, #tpu.memory_space<vmem>>, %arg3: memref<1x1x256xi32, #tpu.memory_space<vmem>>, %arg4: memref<1x1x128xf32, #tpu.memory_space<vmem>>) attributes {dimension_semantics = [#tpu.dimension_semantics<parallel>, #tpu.dimension_semantics<parallel>], iteration_bounds = array<i64: 2, 1>, scalar_prefetch = 0 : i64, scratch_operands = 0 : i64, tpu.core_type = #tpu.core_type<tc>, window_params = [{transform_indices = @transform_0, window_bounds = array<i64: 1, 4, 256>}, {transform_indices = @transform_1, window_bounds = array<i64: 1, 1, 256>}, {transform_indices = @transform_2, window_bounds = array<i64: 1, 1, 128>}]} {
    %c0 = arith.constant 0 : index
    %c0_0 = arith.constant 0 : index
    %c0_1 = arith.constant 0 : index
    %0 = vector.load %arg2[%c0, %c0_0, %c0_1] : memref<1x4x256xf32, #tpu.memory_space<vmem>>, vector<1x4x256xf32>
    %1 = vector.shape_cast %0 : vector<1x4x256xf32> to vector<4x256xf32>
    %c0_2 = arith.constant 0 : index
    %c0_3 = arith.constant 0 : index
    %c0_4 = arith.constant 0 : index
    %2 = vector.load %arg3[%c0_2, %c0_3, %c0_4] : memref<1x1x256xi32, #tpu.memory_space<vmem>>, vector<1x1x256xi32>
    %3 = vector.shape_cast %2 : vector<1x1x256xi32> to vector<1x256xi32>
    %cst = arith.constant dense<0xFF800000> : vector<256xf32>
    %4 = vector.multi_reduction <maximumf>, %1, %cst [0] : vector<4x256xf32> to vector<256xf32>
    %5 = vector.shape_cast %4 : vector<256xf32> to vector<1x256xf32>
    %6 = vector.broadcast %5 : vector<1x256xf32> to vector<4x256xf32>
    %7 = arith.subf %1, %6 : vector<4x256xf32>
    %8 = math.exp %7 : vector<4x256xf32>
    %cst_5 = arith.constant dense<0.000000e+00> : vector<256xf32>
    %9 = vector.multi_reduction <add>, %8, %cst_5 [0] : vector<4x256xf32> to vector<256xf32>
    %10 = vector.shape_cast %9 : vector<256xf32> to vector<1x256xf32>
    %11 = math.log %10 : vector<1x256xf32>
    %12 = arith.addf %11, %5 : vector<1x256xf32>
    %13 = tpu.iota {dimensions = array<i32: 0>} : vector<4x256xi32>
    %14 = vector.broadcast %3 : vector<1x256xi32> to vector<4x256xi32>
    %15 = arith.cmpi eq, %13, %14 : vector<4x256xi32>
    %cst_6 = arith.constant 0.000000e+00 : f32
    %16 = vector.broadcast %cst_6 : f32 to vector<4x256xf32>
    %17 = arith.select %15, %1, %16 : vector<4x256xi1>, vector<4x256xf32>
    %cst_7 = arith.constant dense<0.000000e+00> : vector<256xf32>
    %18 = vector.multi_reduction <add>, %17, %cst_7 [0] : vector<4x256xf32> to vector<256xf32>
    %19 = vector.shape_cast %18 : vector<256xf32> to vector<1x256xf32>
    %cst_8 = arith.constant 0.000000e+00 : f32
    %20 = vector.broadcast %cst_8 : f32 to vector<4x256xf32>
    %21 = arith.select %15, %8, %20 : vector<4x256xi1>, vector<4x256xf32>
    %cst_9 = arith.constant dense<0.000000e+00> : vector<256xf32>
    %22 = vector.multi_reduction <add>, %21, %cst_9 [0] : vector<4x256xf32> to vector<256xf32>
    %23 = vector.shape_cast %22 : vector<256xf32> to vector<1x256xf32>
    %24 = arith.subf %19, %12 : vector<1x256xf32>
    %25 = arith.divf %23, %10 : vector<1x256xf32>
    %cst_10 = arith.constant 1.000000e+00 : f32
    %26 = vector.broadcast %cst_10 : f32 to vector<1x256xf32>
    %27 = arith.subf %26, %25 : vector<1x256xf32>
    %28 = arith.mulf %27, %27 : vector<1x256xf32>
    %cst_11 = arith.constant -1.000000e+00 : f32
    %29 = vector.broadcast %cst_11 : f32 to vector<1x256xf32>
    %30 = arith.mulf %29, %28 : vector<1x256xf32>
    %31 = arith.mulf %30, %24 : vector<1x256xf32>
    %32 = vector.shape_cast %31 : vector<1x256xf32> to vector<1x1x256xf32>
    %cst_12 = arith.constant dense<0.000000e+00> : vector<1xf32>
    %33 = vector.multi_reduction <add>, %32, %cst_12 [1, 2] : vector<1x1x256xf32> to vector<1xf32>
    %34 = vector.shape_cast %33 : vector<1xf32> to vector<1x1x1xf32>
    %35 = vector.extract %34[0, 0, 0] : f32 from vector<1x1x1xf32>
    %36 = vector.broadcast %35 : f32 to vector<1x1x128xf32>
    %c0_13 = arith.constant 0 : index
    %c0_14 = arith.constant 0 : index
    %c0_15 = arith.constant 0 : index
    %37 = vector.load %arg4[%c0_13, %c0_14, %c0_15] : memref<1x1x128xf32, #tpu.memory_space<vmem>>, vector<1x1x128xf32>
    tpu.vector_store %arg4[%c0_13, %c0_14, %c0_15], %36 {strides = array<i32>} : memref<1x1x128xf32, #tpu.memory_space<vmem>>, vector<1x1x128xf32>,
    return
  }
  func.func @transform_0(%arg0: i32, %arg1: i32) -> (i32, i32, i32) {
    %c0_i32 = arith.constant 0 : i32
    %c0_i32_0 = arith.constant 0 : i32
    return %arg0, %c0_i32, %arg1 : i32, i32, i32
  }
  func.func @transform_1(%arg0: i32, %arg1: i32) -> (i32, i32, i32) {
    %c0_i32 = arith.constant 0 : i32
    %c0_i32_0 = arith.constant 0 : i32
    return %arg0, %c0_i32, %arg1 : i32, i32, i32
  }
  func.func @transform_2(%arg0: i32, %arg1: i32) -> (i32, i32, i32) {
    %c1_i32 = arith.constant 1 : i32
    %0 = arith.muli %arg0, %c1_i32 : i32
    %1 = arith.addi %0, %arg1 : i32
    %c0_i32 = arith.constant 0 : i32
    %c0_i32_0 = arith.constant 0 : i32
    %c0_i32_1 = arith.constant 0 : i32
    return %1, %c0_i32, %c0_i32_0 : i32, i32, i32
  }
}

</mosaic_0001>

<llo_original>
// kernel: tpu_custom_call.1
$region0: #{tpu_custom_call.1}
  #allocation0 [shape = 'u32[]', space=smem, size = 0x4, offset = 0x4, fixed_abs, tag = 'smem constant byte address 0x4 - core index']
  #allocation1 [shape = 'u32[144,128]{1,0:T(1,128)}', space=vmem, size = 0x12000, scoped, tag = 'internal scratch']
  %s0 = inlined_call_operand.hbm [shape: f32[2,4,256], index: 0, kind: input, shape index: {}]
  %s1 = inlined_call_operand.hbm [shape: s32[2,1,256], index: 1, kind: input, shape index: {}]
  %s2 = inlined_call_operand.hbm [shape: f32[2,1,128], index: 2, kind: output, shape index: {}]
  %s3 = sld [smem:[#allocation0]]
  $region49: #{tpu_custom_call.1} parent=0
    _
  %s5 = ssub.s32 1, %s3
  %s6 = scalar_select 0, %s5, %s3
  $region1: #{tpu_custom_call.1} parent=0
    #allocation2 [shape = 'u8[8192]{0}', space=vmem, size = 0x2000, scoped, tag = 'input window, operand 0']
    #allocation3 [shape = 's32[2]{0}', space=sflag, size = 0x8, scoped, tag = 'scoped memory for tpu_custom_call.1']
    #allocation4 [shape = 's32[2]{0}', space=sflag, size = 0x8, scoped, tag = 'scoped memory for tpu_custom_call.1']
    #allocation5 [shape = 'u8[2048]{0}', space=vmem, size = 0x800, scoped, tag = 'input window, operand 1']
    #allocation6 [shape = 's32[2]{0}', space=sflag, size = 0x8, scoped, tag = 'scoped memory for tpu_custom_call.1']
    #allocation7 [shape = 'u8[1024]{0}', space=vmem, size = 0x400, scoped, tag = 'output window, operand 0']
    %7 = vsyncpa [#allocation3], 0
    %s8 = scalar_lea.sflag [#allocation3], 1
    %9 = vsyncpa %s8, 0
    %10 = vsyncpa [#allocation6], 0
    %s11 = scalar_lea.sflag [#allocation6], 1
    %12 = vsyncpa %s11, 0
    %13 = vsyncpa [#allocation4], 0
    %s14 = scalar_lea.sflag [#allocation4], 1
    %15 = vsyncpa %s14, 0
    loop: start=0, step=1, limit=4
    $region2: #{tpu_custom_call.1} parent=1 // loop_pre_header
      _
    $region3: #{tpu_custom_call.1} parent=1 // loop_header
      %s17 = sphi 0, %s21
      %p18 = scmp.ge.s32.totalorder %s17, 4
      %s24 = sphi 0, %s36
      %s25 = sphi 0, %s32
      %s26 = sphi 0, %s24
      %s27 = sphi 0, %s25
      %s28 = sphi 0, %s26
      %s29 = sphi 0, %s27
      %s41 = sphi 0, %s43
      %s44 = sphi 0, %s41
      %s45 = sphi 0, %s44
      %s61 = sphi 0, %s45
      %s69 = sphi 0, %s71
      %s72 = sphi 0, %s69
      %s73 = sphi 0, %s72
      %s89 = sphi 0, %s73
      %s97 = sphi 0, %s99
      %s100 = sphi 0, %s97
      %s101 = sphi 0, %s100
      %s117 = sphi 0, %s101
    $region4: #{tpu_custom_call.1} parent=1 // loop_header_branch
      %20 = sbr.rel (%p18) target = $region8
    $region5: #{tpu_custom_call.1} parent=1 // loop_body
      %s22 = ssub.s32 %s17, 1
      %s23 = ssub.s32 %s17, 2
      %s30 = sadd.s32 1, %s25
      %p31 = scmp.ge.s32.totalorder %s30, 1
      %s32 = scalar_select %p31, 0, %s30
      %s33 = sadd.s32 1, %s24
      %s34 = scalar_select %p31, %s33, %s24
      %p35 = scmp.ge.s32.totalorder %s34, 2
      %s36 = scalar_select %p35, 0, %s34
      %s37 = ssub.s32 %s24, %s36
      %s38 = ssub.s32 %s25, %s32
      %s39 = sor.u32 %s37, %s38
      %p40 = scmp.eq.s32.totalorder %s39, 0
      %s42 = sadd.s32 %s41, 1
      %s43 = scalar_select %p40, %s41, %s42
      %p46 = pneg %p40
      %p47 = scmp.eq.s32.totalorder %s17, 1
      %p48 = por %p46, %p47
      %p49 = scmp.ne.s32.totalorder %s41, %s44
      %p50 = scmp.eq.s32.totalorder %s17, 0
      %p51 = por %p49, %p50
      %p52 = scmp.ne.s32.totalorder %s41, %s44
      %p53 = scmp.eq.s32.totalorder %s22, 1
      %p54 = por %p52, %p53
      %p55 = scmp.ne.s32.totalorder %s44, %s45
      %p56 = scmp.eq.s32.totalorder %s22, 0
      %p57 = por %p55, %p56
      %p58 = scmp.ne.s32.totalorder %s44, %s45
      %p59 = scmp.eq.s32.totalorder %s23, 1
      %p60 = por %p58, %p59
      %p62 = scmp.ne.s32.totalorder %s45, %s61
      %p63 = scmp.eq.s32.totalorder %s23, 0
      %p64 = por %p62, %p63
      %s65 = ssub.s32 %s24, %s36
      %s66 = ssub.s32 %s25, %s32
      %s67 = sor.u32 %s65, %s66
      %p68 = scmp.eq.s32.totalorder %s67, 0
      %s70 = sadd.s32 %s69, 1
      %s71 = scalar_select %p68, %s69, %s70
      %p74 = pneg %p68
      %p75 = scmp.eq.s32.totalorder %s17, 1
      %p76 = por %p74, %p75
      %p77 = scmp.ne.s32.totalorder %s69, %s72
      %p78 = scmp.eq.s32.totalorder %s17, 0
      %p79 = por %p77, %p78
      %p80 = scmp.ne.s32.totalorder %s69, %s72
      %p81 = scmp.eq.s32.totalorder %s22, 1
      %p82 = por %p80, %p81
      %p83 = scmp.ne.s32.totalorder %s72, %s73
      %p84 = scmp.eq.s32.totalorder %s22, 0
      %p85 = por %p83, %p84
      %p86 = scmp.ne.s32.totalorder %s72, %s73
      %p87 = scmp.eq.s32.totalorder %s23, 1
      %p88 = por %p86, %p87
      %p90 = scmp.ne.s32.totalorder %s73, %s89
      %p91 = scmp.eq.s32.totalorder %s23, 0
      %p92 = por %p90, %p91
      %s93 = sadd.s32 %s24, %s25
      %s94 = sadd.s32 %s36, %s32
      %s95 = ssub.s32 %s93, %s94
      %p96 = scmp.eq.s32.totalorder %s95, 0
      %s98 = sadd.s32 %s97, 1
      %s99 = scalar_select %p96, %s97, %s98
      %p102 = pneg %p96
      %p103 = scmp.eq.s32.totalorder %s17, 1
      %p104 = por %p102, %p103
      %p105 = scmp.ne.s32.totalorder %s97, %s100
      %p106 = scmp.eq.s32.totalorder %s17, 0
      %p107 = por %p105, %p106
      %p108 = scmp.ne.s32.totalorder %s97, %s100
      %p109 = scmp.eq.s32.totalorder %s22, 1
      %p110 = por %p108, %p109
      %p111 = scmp.ne.s32.totalorder %s100, %s101
      %p112 = scmp.eq.s32.totalorder %s22, 0
      %p113 = por %p111, %p112
      %p114 = scmp.ne.s32.totalorder %s100, %s101
      %p115 = scmp.eq.s32.totalorder %s23, 1
      %p116 = por %p114, %p115
      %p118 = scmp.ne.s32.totalorder %s101, %s117
      %p119 = scmp.eq.s32.totalorder %s23, 0
      %p120 = por %p118, %p119
      %p121 = scmp.le.s32.totalorder 1, %s17
      %p122 = scmp.lt.s32.totalorder %s17, 3
      %p123 = pnand %p121, %p122
      %p124 = pneg %p123
      // Predicated region
      $region9: #{tpu_custom_call.1} parent=5 // pred_check
        _
      $region10: #{tpu_custom_call.1} parent=5 // pred_check_branch
        %126 = sbr.rel (%p123) target = $region12
      $region11: #{tpu_custom_call.1} parent=5 // pred_region
        %s127 = ssub.s32 %s17, 1
      $region12: #{tpu_custom_call.1} parent=5 // pred_fallthru
        _
      %p128 = scmp.lt.s32.totalorder %s17, 2
      // Predicated region
      $region13: #{tpu_custom_call.1} parent=5 // pred_check
        %p129 = pneg %p128
      $region14: #{tpu_custom_call.1} parent=5 // pred_check_branch
        %131 = sbr.rel (%p129) target = $region16
      $region15: #{tpu_custom_call.1} parent=5 // pred_region
        // Predicated region
        $region17: #{tpu_custom_call.1} parent=15 // pred_check
          %p132 = pneg %p51
        $region18: #{tpu_custom_call.1} parent=15 // pred_check_branch
          %134 = sbr.rel (%p132) target = $region20
        $region19: #{tpu_custom_call.1} parent=15 // pred_region
          %s135 = sand.u32 %s41, 1
          %s136 = scalar_lea.sflag [#allocation3], %s135
          %s137 = sand.u32 %s41, 1
          %s138 = smul.addr %s137, 8
          %s139 = scalar_lea.vmem [#allocation2], %s138
          %s140 = smul.u32 2, %s25
          %s142 = ssub.s32 128, 128
          %143 = vsyncadd %s136, %s142
          %s144 = smul.addr %s24, 2
          %s145 = sadd.s32 %s140, %s144
          %s146 = smul.addr %s145, 64
          %s147 = scalar_lea.hbm %s0, %s146
          %s149 = sshll.u32 %s139, 4
          %s150 = int_to_ptr.vmem [resolvable:$true] %s149
          %152 = dma.hbm_to_vmem [thread:$0]  %s147, 128, %s150, %s136
        $region20: #{tpu_custom_call.1} parent=15 // pred_fallthru
          _
        // Predicated region
        $region21: #{tpu_custom_call.1} parent=15 // pred_check
          %p153 = pneg %p79
        $region22: #{tpu_custom_call.1} parent=15 // pred_check_branch
          %155 = sbr.rel (%p153) target = $region24
        $region23: #{tpu_custom_call.1} parent=15 // pred_region
          %s156 = sand.u32 %s69, 1
          %s157 = scalar_lea.sflag [#allocation6], %s156
          %s158 = sand.u32 %s69, 1
          %s159 = smul.addr %s158, 2
          %s160 = scalar_lea.vmem [#allocation5], %s159
          %s161 = smul.u32 2, %s25
          %s163 = ssub.s32 32, 32
          %164 = vsyncadd %s157, %s163
          %s165 = smul.addr %s24, 2
          %s166 = sadd.s32 %s161, %s165
          %s167 = smul.addr %s166, 16
          %s168 = scalar_lea.hbm %s1, %s167
          %s170 = sshll.u32 %s160, 4
          %s171 = int_to_ptr.vmem [resolvable:$true] %s170
          %173 = dma.hbm_to_vmem [thread:$0]  %s168, 32, %s171, %s157
        $region24: #{tpu_custom_call.1} parent=15 // pred_fallthru
          _
      $region16: #{tpu_custom_call.1} parent=5 // pred_fallthru
        _
      %p174 = scmp.le.s32.totalorder 1, %s17
      %p175 = scmp.lt.s32.totalorder %s17, 3
      %p176 = pnand %p174, %p175
      %p177 = pneg %p176
      // Predicated region
      $region25: #{tpu_custom_call.1} parent=5 // pred_check
        _
      $region26: #{tpu_custom_call.1} parent=5 // pred_check_branch
        %179 = sbr.rel (%p176) target = $region28
      $region27: #{tpu_custom_call.1} parent=5 // pred_region
        %s180 = ssub.s32 %s17, 1
        %s181 = sand.u32 %s44, 1
        %s182 = scalar_lea.sflag [#allocation3], %s181
        %s183 = sand.u32 %s44, 1
        %s184 = smul.addr %s183, 8
        %s185 = scalar_lea.vmem [#allocation2], %s184
        // Predicated region
        $region29: #{tpu_custom_call.1} parent=27 // pred_check
          %p186 = pneg %p57
        $region30: #{tpu_custom_call.1} parent=27 // pred_check_branch
          %188 = sbr.rel (%p186) target = $region32
        $region31: #{tpu_custom_call.1} parent=27 // pred_region
          %189 = dma.done %s182, 128
        $region32: #{tpu_custom_call.1} parent=27 // pred_fallthru
          _
        %s190 = sand.u32 %s72, 1
        %s191 = scalar_lea.sflag [#allocation6], %s190
        %s192 = sand.u32 %s72, 1
        %s193 = smul.addr %s192, 2
        %s194 = scalar_lea.vmem [#allocation5], %s193
        // Predicated region
        $region33: #{tpu_custom_call.1} parent=27 // pred_check
          %p195 = pneg %p85
        $region34: #{tpu_custom_call.1} parent=27 // pred_check_branch
          %197 = sbr.rel (%p195) target = $region36
        $region35: #{tpu_custom_call.1} parent=27 // pred_region
          %198 = dma.done %s191, 32
        $region36: #{tpu_custom_call.1} parent=27 // pred_fallthru
          _
        %s199 = sand.u32 %s44, 1
        %s200 = scalar_lea.sflag [#allocation3], %s199
        %s201 = sand.u32 %s44, 1
        %s202 = smul.addr %s201, 8
        %s203 = scalar_lea.vmem [#allocation2], %s202
        %p204 = pneg %p57
        %p205 = pneg %p54
        %s206 = sand.u32 %s72, 1
        %s207 = scalar_lea.sflag [#allocation6], %s206
        %s208 = sand.u32 %s72, 1
        %s209 = smul.addr %s208, 2
        %s210 = scalar_lea.vmem [#allocation5], %s209
        %p211 = pneg %p85
        %p212 = pneg %p82
        %p213 = pneg %p113
        %p214 = pneg %p110
        %s215 = sand.u32 %s100, 1
        %s216 = scalar_lea.sflag [#allocation4], %s215
        %s217 = sand.u32 %s100, 1
        %s218 = scalar_lea.vmem [#allocation7], %s217
        %s219 = smul.u32 2, %s27
        %s220 = smul.u32 2, %s27
        %s221 = sadd.s32 %s26, %s27
        %v222 = vld [vmem:[%s185] sm:$0xff]
        %v223 = vld [vmem:[%s194] sm:$0x3]
        %v225 = vcombine.high %v222, %v222
        %vm227 = vcmask 1043456
        %v228 = vsel %vm227, %v222, -inf
        %v229 = vrot.slane %v228, 4
        %v230 = vmax.f32 %v228, %v229
        %v231 = vrot.slane %v230, 2
        %v232 = vmax.f32 %v230, %v231
        %v233 = vrot.slane %v232, 1
        %v234 = vmax.f32 %v232, %v233
        %v235 = vsel %vm227, %v225, -inf
        %v236 = vrot.slane %v235, 4
        %v237 = vmax.f32 %v235, %v236
        %v238 = vrot.slane %v237, 2
        %v239 = vmax.f32 %v237, %v238
        %v240 = vrot.slane %v239, 1
        %v241 = vmax.f32 %v239, %v240
        %v244 = vcombine.low %v234, %v241
        %v246 = vsub.f32 %v222, %v244
        %v247 = vmul.f32 %v246, 1.442695
        %v248 = vpow.pop %v247
        %v250 = vcombine.high %v248, %v248
        %v252 = vsel %vm227, %v248, 0.0
        %v253 = vrot.slane %v252, 4
        %v254 = vadd.f32 %v252, %v253
        %v255 = vrot.slane %v254, 2
        %v256 = vadd.f32 %v254, %v255
        %v257 = vrot.slane %v256, 1
        %v258 = vadd.f32 %v256, %v257
        %v259 = vsel %vm227, %v250, 0.0
        %v260 = vrot.slane %v259, 4
        %v261 = vadd.f32 %v259, %v260
        %v262 = vrot.slane %v261, 2
        %v263 = vadd.f32 %v261, %v262
        %v264 = vrot.slane %v263, 1
        %v265 = vadd.f32 %v263, %v264
        %v266 = vlog2.pop %v258
        %v267 = vmul.f32 %v266, 0.6931472
        %v268 = vlog2.pop %v265
        %v269 = vmul.f32 %v268, 0.6931472
        %v270 = vadd.f32 %v267, %v234
        %v271 = vadd.f32 %v269, %v241
        %v272 = vlaneseq
        %v273 = vshrl.u32 %v272, 7
        %v274 = vlaneseq
        %v275 = vshrl.u32 %v274, 7
        %v276 = vsub.s32 0, %v275
        %v277 = vrot.slane %v223, %v276
        %v278 = vlaneseq
        %v279 = vshrl.u32 %v278, 7
        %v280 = vsub.s32 1, %v279
        %v281 = vrot.slane %v223, %v280
        %vm282 = vcmp.eq.s32.totalorder %v273, %v277
        %vm283 = vcmp.eq.s32.totalorder %v273, %v281
        %v284 = vsel %vm282, %v222, 0.0
        %v285 = vsel %vm283, %v225, 0.0
        %v286 = vsel %vm227, %v284, 0.0
        %v287 = vrot.slane %v286, 4
        %v288 = vadd.f32 %v286, %v287
        %v289 = vrot.slane %v288, 2
        %v290 = vadd.f32 %v288, %v289
        %v291 = vrot.slane %v290, 1
        %v292 = vadd.f32 %v290, %v291
        %v293 = vsel %vm227, %v285, 0.0
        %v294 = vrot.slane %v293, 4
        %v295 = vadd.f32 %v293, %v294
        %v296 = vrot.slane %v295, 2
        %v297 = vadd.f32 %v295, %v296
        %v298 = vrot.slane %v297, 1
        %v299 = vadd.f32 %v297, %v298
        %v300 = vsel %vm282, %v248, 0.0
        %v301 = vsel %vm283, %v250, 0.0
        %v302 = vsel %vm227, %v300, 0.0
        %v303 = vrot.slane %v302, 4
        %v304 = vadd.f32 %v302, %v303
        %v305 = vrot.slane %v304, 2
        %v306 = vadd.f32 %v304, %v305
        %v307 = vrot.slane %v306, 1
        %v308 = vadd.f32 %v306, %v307
        %v309 = vsel %vm227, %v301, 0.0
        %v310 = vrot.slane %v309, 4
        %v311 = vadd.f32 %v309, %v310
        %v312 = vrot.slane %v311, 2
        %v313 = vadd.f32 %v311, %v312
        %v314 = vrot.slane %v313, 1
        %v315 = vadd.f32 %v313, %v314
        %v316 = vsub.f32 %v292, %v270
        %v317 = vsub.f32 %v299, %v271
        %v318 = vrcp.pop %v258
        %v319 = vmul.f32 %v308, %v318
        %v320 = vrcp.pop %v265
        %v321 = vmul.f32 %v315, %v320
        %v322 = vsub.f32 1.0, %v319
        %v323 = vsub.f32 1.0, %v321
        %v324 = vmul.f32 %v322, %v322
        %v325 = vmul.f32 %v323, %v323
        %v326 = vmul.f32 %v324, -1.0
        %v327 = vmul.f32 %v325, -1.0
        %v328 = vmul.f32 %v326, %v316
        %v329 = vmul.f32 %v327, %v317
        %vm330 = vcmask 1040384
        %v331 = vsel %vm330, %v328, 0.0
        %v332 = vsel %vm330, %v329, 0.0
        %v333 = vadd.f32 %v331, %v332
        %334 = vadd.xlane.f32.xlu0 %v333
        %v335 = vpop.xlane.xlu0 %334
        %v336 = vrot.slane %v335, 4
        %v337 = vadd.f32 %v335, %v336
        %v338 = vrot.slane %v337, 2
        %v339 = vadd.f32 %v337, %v338
        %v340 = vrot.slane %v339, 1
        %v341 = vadd.f32 %v339, %v340
        %s342 = vtos %v341
        %v343 = vstv %s342
        %344 = vst [vmem:[%s218] sm:$0x1] %v343
        %s345 = sand.u32 %s100, 1
        %s346 = scalar_lea.sflag [#allocation4], %s345
        %s347 = sand.u32 %s100, 1
        %s348 = scalar_lea.vmem [#allocation7], %s347
        // Predicated region
        $region37: #{tpu_custom_call.1} parent=27 // pred_check
          %p349 = pneg %p110
        $region38: #{tpu_custom_call.1} parent=27 // pred_check_branch
          %351 = sbr.rel (%p349) target = $region40
        $region39: #{tpu_custom_call.1} parent=27 // pred_region
          %s352 = sadd.s32 %s26, %s27
          %s354 = ssub.s32 16, 16
          %355 = vsyncadd %s346, %s354
          %s356 = smul.addr %s352, 16
          %s357 = scalar_lea.hbm %s2, %s356
          %s359 = sshll.u32 %s348, 4
          %s360 = int_to_ptr.vmem [resolvable:$true] %s359
          %362 = dma.vmem_to_hbm [thread:$0]  %s360, 16, %s357, %s346
        $region40: #{tpu_custom_call.1} parent=27 // pred_fallthru
          _
      $region28: #{tpu_custom_call.1} parent=5 // pred_fallthru
        _
      %p363 = scmp.le.s32.totalorder 2, %s17
      // Predicated region
      $region41: #{tpu_custom_call.1} parent=5 // pred_check
        %p364 = pneg %p363
      $region42: #{tpu_custom_call.1} parent=5 // pred_check_branch
        %366 = sbr.rel (%p364) target = $region44
      $region43: #{tpu_custom_call.1} parent=5 // pred_region
        %s367 = ssub.s32 %s17, 2
        // Predicated region
        $region45: #{tpu_custom_call.1} parent=43 // pred_check
          %p368 = pneg %p116
        $region46: #{tpu_custom_call.1} parent=43 // pred_check_branch
          %370 = sbr.rel (%p368) target = $region48
        $region47: #{tpu_custom_call.1} parent=43 // pred_region
          %s371 = sand.u32 %s101, 1
          %s372 = scalar_lea.sflag [#allocation4], %s371
          %s373 = sand.u32 %s101, 1
          %s374 = scalar_lea.vmem [#allocation7], %s373
          %375 = dma.done %s372, 16
        $region48: #{tpu_custom_call.1} parent=43 // pred_fallthru
          _
      $region44: #{tpu_custom_call.1} parent=5 // pred_fallthru
        _
    $region6: #{tpu_custom_call.1} parent=1 // loop_footer
      %s21 = sadd.s32 1, %s17
    $region7: #{tpu_custom_call.1} parent=1 // loop_footer_branch
      %16 = sbr.rel target = $region3
    $region8: #{tpu_custom_call.1} parent=1 // loop_exit
      _
    %376 = vsyncpa [#allocation3], 1
    %s377 = scalar_lea.sflag [#allocation3], 1
    %378 = vsyncpa %s377, 1
    %379 = vsyncpa [#allocation6], 1
    %s380 = scalar_lea.sflag [#allocation6], 1
    %381 = vsyncpa %s380, 1
    %382 = vsyncpa [#allocation4], 1
    %s383 = scalar_lea.sflag [#allocation4], 1
    %384 = vsyncpa %s383, 1

</llo_original>
